<compile_context>
chip_gen: v7x
topology: tpu7x:2x2x1
jax: 0.10.0
libtpu: 0.0.40
codegen_flags: <defaults>
</compile_context>

<pallas_src>
import jax
import jax.numpy as jnp
from jax.experimental import pallas as pl
from jax.experimental.pallas import tpu as pltpu

NUM_CLASSES = 10
H1 = 128
H2 = 256
OUT = 2
OUT_PAD = 128      # lane-dense output width (fc3 padded with zero columns)
TB_MAX = 1024      # batch tile cap, sized against v7x's 64 MiB VMEM (10->128 lane padding)


def _round_up(x, m):
    return (x + m - 1) // m * m


def attack_mlp_kernel(x_ref, w1_ref, b1_ref, w2_ref, b2_ref, w3_ref, b3_ref, o_ref):
    # fc1 + ReLU : bf16 operands -> f32 accumulate on the MXU, f32 bias/ReLU on the VPU.
    x = x_ref[...]
    h1 = jnp.dot(x, w1_ref[...], preferred_element_type=jnp.float32) + b1_ref[...]
    h1 = jnp.maximum(h1, 0.0)
    # fc2 + ReLU
    h2 = jnp.dot(h1.astype(jnp.bfloat16), w2_ref[...],
                 preferred_element_type=jnp.float32) + b2_ref[...]
    h2 = jnp.maximum(h2, 0.0)
    # fc3 (no activation).  Columns >= OUT are zero-padded; sliced off in the wrapper.
    out = jnp.dot(h2.astype(jnp.bfloat16), w3_ref[...],
                  preferred_element_type=jnp.float32) + b3_ref[...]
    o_ref[...] = out


def attack_model_forward(x, params):
    """x: (B, NUM_CLASSES) float32 -> (B, OUT) float32."""
    w1, b1, w2, b2, w3, b3 = params
    B = x.shape[0]

    # Batch tile: multiple of 8 (sublane), capped at TB_MAX.
    TB = min(TB_MAX, _round_up(B, 8))
    B_pad = _round_up(B, TB)

    # bf16 matmul operands; biases stay f32 (f32 accumulate / bias / ReLU in-kernel).
    xb = x.astype(jnp.bfloat16)
    if B_pad != B:
        xb = jnp.pad(xb, ((0, B_pad - B), (0, 0)))
    w1b = w1.astype(jnp.bfloat16)
    w2b = w2.astype(jnp.bfloat16)
    # Lane-dense output: pad fc3 weight/bias to OUT_PAD columns with zeros.
    w3p = jnp.pad(w3, ((0, 0), (0, OUT_PAD - OUT))).astype(jnp.bfloat16)
    b3p = jnp.pad(b3, ((0, 0), (0, OUT_PAD - OUT)))

    grid = (B_pad // TB,)

    flops = 2 * B_pad * (NUM_CLASSES * H1 + H1 * H2 + H2 * OUT_PAD)
    bytes_accessed = (
        B_pad * NUM_CLASSES * 2                              # x stream (bf16)
        + (NUM_CLASSES * H1 + H1 * H2 + H2 * OUT_PAD) * 2    # weights (bf16)
        + (H1 + H2 + OUT_PAD) * 4                            # biases (f32)
        + B_pad * OUT_PAD * 4                                # padded output (f32)
    )

    out_padded = pl.pallas_call(
        attack_mlp_kernel,
        out_shape=jax.ShapeDtypeStruct((B_pad, OUT_PAD), jnp.float32),
        grid=grid,
        in_specs=[
            pl.BlockSpec((TB, NUM_CLASSES), lambda i: (i, 0)),   # x: streamed per batch tile
            pl.BlockSpec((NUM_CLASSES, H1), lambda i: (0, 0)),   # weights/biases: VMEM-resident
            pl.BlockSpec((1, H1), lambda i: (0, 0)),
            pl.BlockSpec((H1, H2), lambda i: (0, 0)),
            pl.BlockSpec((1, H2), lambda i: (0, 0)),
            pl.BlockSpec((H2, OUT_PAD), lambda i: (0, 0)),
            pl.BlockSpec((1, OUT_PAD), lambda i: (0, 0)),
        ],
        out_specs=pl.BlockSpec((TB, OUT_PAD), lambda i: (i, 0)),
        compiler_params=pltpu.CompilerParams(
            dimension_semantics=("parallel",)),   # shard batch tiles across v7x's 2 TCs
        cost_estimate=pl.CostEstimate(
            flops=flops, transcendentals=0, bytes_accessed=bytes_accessed),
    )(xb, w1b, b1, w2b, b2, w3p, b3p)

    return out_padded[:B, :OUT]


def init_params(key):
    """Deterministic init mimicking nn.Linear's uniform(-1/sqrt(fan_in), 1/sqrt(fan_in))."""
    ks = jax.random.split(key, 6)

    def lin(kw, kb, fan_in, fan_out):
        bound = 1.0 / jnp.sqrt(float(fan_in))
        w = jax.random.uniform(kw, (fan_in, fan_out), jnp.float32, -bound, bound)
        b = jax.random.uniform(kb, (1, fan_out), jnp.float32, -bound, bound)
        return w, b

    w1, b1 = lin(ks[0], ks[1], NUM_CLASSES, H1)
    w2, b2 = lin(ks[2], ks[3], H1, H2)
    w3, b3 = lin(ks[4], ks[5], H2, OUT)
    return (w1, b1, w2, b2, w3, b3)


def reference_forward(x, params):
    """Pure-JAX reference matching the kernel's numerics (bf16 operands, f32 accumulate)."""
    w1, b1, w2, b2, w3, b3 = params
    bf = lambda a: a.astype(jnp.bfloat16).astype(jnp.float32)
    h1 = jnp.maximum(bf(x) @ bf(w1) + b1, 0.0)
    h2 = jnp.maximum(bf(h1) @ bf(w2) + b2, 0.0)
    return bf(h2) @ bf(w3) + b3


if __name__ == "__main__":
    key = jax.random.PRNGKey(0)
    k_in, k_params = jax.random.split(key)

    B = 8  # small batch (TB adapts; for B in the thousands the grid pipelines batch tiles)
    x = jax.random.normal(k_in, (B, NUM_CLASSES), jnp.float32)
    params = init_params(k_params)

    out = attack_model_forward(x, params)
    out = jax.block_until_ready(out)

    ref = reference_forward(x, params)
    assert out.shape == (B, OUT), out.shape
    assert jnp.allclose(out, ref, atol=1e-2, rtol=1e-2), "mismatch vs reference"

    print("KERNEL_OK")
</pallas_src>

<mosaic_0001>
module attributes {stable_mosaic.version = 11 : i64} {
  func.func @attack_mlp_kernel(%arg0: i32, %arg1: memref<8x10xbf16, #tpu.memory_space<vmem>>, %arg2: memref<10x128xbf16, #tpu.memory_space<vmem>>, %arg3: memref<1x128xf32, #tpu.memory_space<vmem>>, %arg4: memref<128x256xbf16, #tpu.memory_space<vmem>>, %arg5: memref<1x256xf32, #tpu.memory_space<vmem>>, %arg6: memref<256x128xbf16, #tpu.memory_space<vmem>>, %arg7: memref<1x128xf32, #tpu.memory_space<vmem>>, %arg8: memref<8x128xf32, #tpu.memory_space<vmem>>) attributes {dimension_semantics = [#tpu.dimension_semantics<parallel>], iteration_bounds = array<i64: 1>, scalar_prefetch = 0 : i64, scratch_operands = 0 : i64, tpu.core_type = #tpu.core_type<tc>, window_params = [{transform_indices = @transform_0, window_bounds = array<i64: 8, 10>}, {pipeline_mode = #tpu.pipeline_mode<synchronous>, transform_indices = @transform_1, window_bounds = array<i64: 10, 128>}, {pipeline_mode = #tpu.pipeline_mode<synchronous>, transform_indices = @transform_2, window_bounds = array<i64: 1, 128>}, {pipeline_mode = #tpu.pipeline_mode<synchronous>, transform_indices = @transform_3, window_bounds = array<i64: 128, 256>}, {pipeline_mode = #tpu.pipeline_mode<synchronous>, transform_indices = @transform_4, window_bounds = array<i64: 1, 256>}, {pipeline_mode = #tpu.pipeline_mode<synchronous>, transform_indices = @transform_5, window_bounds = array<i64: 256, 128>}, {pipeline_mode = #tpu.pipeline_mode<synchronous>, transform_indices = @transform_6, window_bounds = array<i64: 1, 128>}, {transform_indices = @transform_7, window_bounds = array<i64: 8, 128>}]} {
    %c0 = arith.constant 0 : index
    %c0_0 = arith.constant 0 : index
    %0 = vector.load %arg1[%c0, %c0_0] : memref<8x10xbf16, #tpu.memory_space<vmem>>, vector<8x10xbf16>
    %c0_1 = arith.constant 0 : index
    %c0_2 = arith.constant 0 : index
    %1 = vector.load %arg2[%c0_1, %c0_2] : memref<10x128xbf16, #tpu.memory_space<vmem>>, vector<10x128xbf16>
    %cst = arith.constant dense<0.000000e+00> : vector<8x128xf32>
    %2 = tpu.matmul %0, %1, %cst {dimension_numbers = #tpu.dot_dimension_numbers<[1], [0], [0], [1], [0, 0, 1, 1], [], []>} : vector<8x10xbf16>, vector<10x128xbf16>, vector<8x128xf32> -> vector<8x128xf32>
    %c0_3 = arith.constant 0 : index
    %c0_4 = arith.constant 0 : index
    %3 = vector.load %arg3[%c0_3, %c0_4] : memref<1x128xf32, #tpu.memory_space<vmem>>, vector<1x128xf32>
    %4 = vector.broadcast %3 : vector<1x128xf32> to vector<8x128xf32>
    %5 = arith.addf %2, %4 : vector<8x128xf32>
    %cst_5 = arith.constant 0.000000e+00 : f32
    %6 = vector.broadcast %cst_5 : f32 to vector<8x128xf32>
    %7 = arith.maximumf %5, %6 : vector<8x128xf32>
    %8 = arith.truncf %7 : vector<8x128xf32> to vector<8x128xbf16>
    %c0_6 = arith.constant 0 : index
    %c0_7 = arith.constant 0 : index
    %9 = vector.load %arg4[%c0_6, %c0_7] : memref<128x256xbf16, #tpu.memory_space<vmem>>, vector<128x256xbf16>
    %cst_8 = arith.constant dense<0.000000e+00> : vector<8x256xf32>
    %10 = tpu.matmul %8, %9, %cst_8 {dimension_numbers = #tpu.dot_dimension_numbers<[1], [0], [0], [1], [0, 0, 1, 1], [], []>} : vector<8x128xbf16>, vector<128x256xbf16>, vector<8x256xf32> -> vector<8x256xf32>
    %c0_9 = arith.constant 0 : index
    %c0_10 = arith.constant 0 : index
    %11 = vector.load %arg5[%c0_9, %c0_10] : memref<1x256xf32, #tpu.memory_space<vmem>>, vector<1x256xf32>
    %12 = vector.broadcast %11 : vector<1x256xf32> to vector<8x256xf32>
    %13 = arith.addf %10, %12 : vector<8x256xf32>
    %cst_11 = arith.constant 0.000000e+00 : f32
    %14 = vector.broadcast %cst_11 : f32 to vector<8x256xf32>
    %15 = arith.maximumf %13, %14 : vector<8x256xf32>
    %16 = arith.truncf %15 : vector<8x256xf32> to vector<8x256xbf16>
    %c0_12 = arith.constant 0 : index
    %c0_13 = arith.constant 0 : index
    %17 = vector.load %arg6[%c0_12, %c0_13] : memref<256x128xbf16, #tpu.memory_space<vmem>>, vector<256x128xbf16>
    %cst_14 = arith.constant dense<0.000000e+00> : vector<8x128xf32>
    %18 = tpu.matmul %16, %17, %cst_14 {dimension_numbers = #tpu.dot_dimension_numbers<[1], [0], [0], [1], [0, 0, 1, 1], [], []>} : vector<8x256xbf16>, vector<256x128xbf16>, vector<8x128xf32> -> vector<8x128xf32>
    %c0_15 = arith.constant 0 : index
    %c0_16 = arith.constant 0 : index
    %19 = vector.load %arg7[%c0_15, %c0_16] : memref<1x128xf32, #tpu.memory_space<vmem>>, vector<1x128xf32>
    %20 = vector.broadcast %19 : vector<1x128xf32> to vector<8x128xf32>
    %21 = arith.addf %18, %20 : vector<8x128xf32>
    %c0_17 = arith.constant 0 : index
    %c0_18 = arith.constant 0 : index
    %22 = vector.load %arg8[%c0_17, %c0_18] : memref<8x128xf32, #tpu.memory_space<vmem>>, vector<8x128xf32>
    tpu.vector_store %arg8[%c0_17, %c0_18], %21 {strides = array<i32>} : memref<8x128xf32, #tpu.memory_space<vmem>>, vector<8x128xf32>,
    return
  }
  func.func @transform_0(%arg0: i32) -> (i32, i32) {
    %c0_i32 = arith.constant 0 : i32
    %c0_i32_0 = arith.constant 0 : i32
    return %arg0, %c0_i32 : i32, i32
  }
  func.func @transform_1(%arg0: i32) -> (i32, i32) {
    %c0_i32 = arith.constant 0 : i32
    %c0_i32_0 = arith.constant 0 : i32
    %c0_i32_1 = arith.constant 0 : i32
    return %c0_i32, %c0_i32_0 : i32, i32
  }
  func.func @transform_2(%arg0: i32) -> (i32, i32) {
    %c0_i32 = arith.constant 0 : i32
    %c0_i32_0 = arith.constant 0 : i32
    %c0_i32_1 = arith.constant 0 : i32
    return %c0_i32, %c0_i32_0 : i32, i32
  }
  func.func @transform_3(%arg0: i32) -> (i32, i32) {
    %c0_i32 = arith.constant 0 : i32
    %c0_i32_0 = arith.constant 0 : i32
    %c0_i32_1 = arith.constant 0 : i32
    return %c0_i32, %c0_i32_0 : i32, i32
  }
  func.func @transform_4(%arg0: i32) -> (i32, i32) {
    %c0_i32 = arith.constant 0 : i32
    %c0_i32_0 = arith.constant 0 : i32
    %c0_i32_1 = arith.constant 0 : i32
    return %c0_i32, %c0_i32_0 : i32, i32
  }
  func.func @transform_5(%arg0: i32) -> (i32, i32) {
    %c0_i32 = arith.constant 0 : i32
    %c0_i32_0 = arith.constant 0 : i32
    %c0_i32_1 = arith.constant 0 : i32
    return %c0_i32, %c0_i32_0 : i32, i32
  }
  func.func @transform_6(%arg0: i32) -> (i32, i32) {
    %c0_i32 = arith.constant 0 : i32
    %c0_i32_0 = arith.constant 0 : i32
    %c0_i32_1 = arith.constant 0 : i32
    return %c0_i32, %c0_i32_0 : i32, i32
  }
  func.func @transform_7(%arg0: i32) -> (i32, i32) {
    %c0_i32 = arith.constant 0 : i32
    %c0_i32_0 = arith.constant 0 : i32
    return %arg0, %c0_i32 : i32, i32
  }
}

</mosaic_0001>

<llo_original>
// kernel: tpu_custom_call.1
$region0: #{tpu_custom_call.1}
  #allocation0 [shape = 'u32[]', space=smem, size = 0x4, offset = 0x4, fixed_abs, tag = 'smem constant byte address 0x4 - core index']
  #allocation1 [shape = 'u32[144,128]{1,0:T(1,128)}', space=vmem, size = 0x12000, scoped, tag = 'internal scratch']
  %s0 = inlined_call_operand.hbm [shape: bf16[8,10], index: 0, kind: input, shape index: {}]
  %s1 = inlined_call_operand.hbm [shape: bf16[10,128], index: 1, kind: input, shape index: {}]
  %s2 = inlined_call_operand.vmem [shape: f32[1,128], index: 2, kind: input, shape index: {}]
  %s3 = inlined_call_operand.hbm [shape: bf16[128,256], index: 3, kind: input, shape index: {}]
  %s4 = inlined_call_operand.vmem [shape: f32[1,256], index: 4, kind: input, shape index: {}]
  %s5 = inlined_call_operand.hbm [shape: bf16[256,128], index: 5, kind: input, shape index: {}]
  %s6 = inlined_call_operand.vmem [shape: f32[1,128], index: 6, kind: input, shape index: {}]
  %s7 = inlined_call_operand.hbm [shape: f32[8,128], index: 7, kind: output, shape index: {}]
  %s8 = sld [smem:[#allocation0]]
  $region54: #{tpu_custom_call.1} parent=0
    _
  %s10 = ssub.s32 1, %s8
  %s11 = scalar_select 0, %s10, %s8
  $region1: #{tpu_custom_call.1} parent=0
    #allocation2 [shape = 'u8[2048]{0}', space=vmem, size = 0x800, scoped, tag = 'input window, operand 0, single buffered']
    #allocation3 [shape = 's32[1]{0}', space=sflag, size = 0x4, scoped, tag = 'scoped memory for tpu_custom_call.1']
    #allocation4 [shape = 's32[1]{0}', space=sflag, size = 0x4, scoped, tag = 'scoped memory for tpu_custom_call.1']
    #allocation5 [shape = 'u8[4096]{0}', space=vmem, size = 0x1000, scoped, tag = 'input window, operand 1, single buffered']
    #allocation6 [shape = 's32[1]{0}', space=sflag, size = 0x4, scoped, tag = 'scoped memory for tpu_custom_call.1']
    #allocation7 [shape = 'u8[65536]{0}', space=vmem, size = 0x10000, scoped, tag = 'input window, operand 3, single buffered']
    #allocation8 [shape = 'u8[65536]{0}', space=vmem, size = 0x10000, scoped, tag = 'input window, operand 5, single buffered']
    #allocation9 [shape = 's32[1]{0}', space=sflag, size = 0x4, scoped, tag = 'scoped memory for tpu_custom_call.1']
    #allocation10 [shape = 'u8[4096]{0}', space=vmem, size = 0x1000, scoped, tag = 'output window, operand 0, single buffered']
    %12 = vsyncpa [#allocation3], 0
    %13 = vsyncpa [#allocation6], 0
    %14 = vsyncpa [#allocation9], 0
    %15 = vsyncpa [#allocation4], 0
    // Predicated region
    $region2: #{tpu_custom_call.1} parent=1 // pred_check
      _
    $region3: #{tpu_custom_call.1} parent=1 // pred_check_branch
      %17 = sbr.rel (0) target = $region5
    $region4: #{tpu_custom_call.1} parent=1 // pred_region
      %s19 = ssub.s32 64, 64
      %20 = vsyncadd [#allocation3], %s19
      %s22 = sshll.u32 [#allocation2], 4
      %s23 = int_to_ptr.vmem [resolvable:$true] %s22
      %25 = dma.hbm_to_vmem [thread:$0]  %s0, 64, %s23, [#allocation3]
    $region5: #{tpu_custom_call.1} parent=1 // pred_fallthru
      _
    // Predicated region
    $region6: #{tpu_custom_call.1} parent=1 // pred_check
      _
    $region7: #{tpu_custom_call.1} parent=1 // pred_check_branch
      %27 = sbr.rel (0) target = $region9
    $region8: #{tpu_custom_call.1} parent=1 // pred_region
      %s29 = ssub.s32 128, 128
      %30 = vsyncadd [#allocation6], %s29
      %s31 = sshll.u32 [#allocation5], 4
      %s32 = int_to_ptr.vmem [resolvable:$true] %s31
      %37 = dma.hbm_to_vmem [thread:$0]  %s1, 128, %s32, [#allocation6], 64, 64, 4
    $region9: #{tpu_custom_call.1} parent=1 // pred_fallthru
      _
    // Predicated region
    $region10: #{tpu_custom_call.1} parent=1 // pred_check
      _
    $region11: #{tpu_custom_call.1} parent=1 // pred_check_branch
      %39 = sbr.rel (0) target = $region13
    $region12: #{tpu_custom_call.1} parent=1 // pred_region
      _
    $region13: #{tpu_custom_call.1} parent=1 // pred_fallthru
      _
    // Predicated region
    $region14: #{tpu_custom_call.1} parent=1 // pred_check
      _
    $region15: #{tpu_custom_call.1} parent=1 // pred_check_branch
      %41 = sbr.rel (0) target = $region17
    $region16: #{tpu_custom_call.1} parent=1 // pred_region
      %s43 = ssub.s32 2048, 2048
      %44 = vsyncadd [#allocation6], %s43
      %s45 = sshll.u32 [#allocation7], 4
      %s46 = int_to_ptr.vmem [resolvable:$true] %s45
      %51 = dma.hbm_to_vmem [thread:$0]  %s3, 2048, %s46, [#allocation6], 128, 128, 8
    $region17: #{tpu_custom_call.1} parent=1 // pred_fallthru
      _
    // Predicated region
    $region18: #{tpu_custom_call.1} parent=1 // pred_check
      _
    $region19: #{tpu_custom_call.1} parent=1 // pred_check_branch
      %53 = sbr.rel (0) target = $region21
    $region20: #{tpu_custom_call.1} parent=1 // pred_region
      _
    $region21: #{tpu_custom_call.1} parent=1 // pred_fallthru
      _
    // Predicated region
    $region22: #{tpu_custom_call.1} parent=1 // pred_check
      _
    $region23: #{tpu_custom_call.1} parent=1 // pred_check_branch
      %55 = sbr.rel (0) target = $region25
    $region24: #{tpu_custom_call.1} parent=1 // pred_region
      %s57 = ssub.s32 2048, 2048
      %58 = vsyncadd [#allocation9], %s57
      %s59 = sshll.u32 [#allocation8], 4
      %s60 = int_to_ptr.vmem [resolvable:$true] %s59
      %65 = dma.hbm_to_vmem [thread:$0]  %s5, 2048, %s60, [#allocation9], 64, 64, 4
    $region25: #{tpu_custom_call.1} parent=1 // pred_fallthru
      _
    // Predicated region
    $region26: #{tpu_custom_call.1} parent=1 // pred_check
      _
    $region27: #{tpu_custom_call.1} parent=1 // pred_check_branch
      %67 = sbr.rel (0) target = $region29
    $region28: #{tpu_custom_call.1} parent=1 // pred_region
      _
    $region29: #{tpu_custom_call.1} parent=1 // pred_fallthru
      _
    // Predicated region
    $region30: #{tpu_custom_call.1} parent=1 // pred_check
      _
    $region31: #{tpu_custom_call.1} parent=1 // pred_check_branch
      %69 = sbr.rel (0) target = $region33
    $region32: #{tpu_custom_call.1} parent=1 // pred_region
      %70 = dma.done [#allocation3], 64
    $region33: #{tpu_custom_call.1} parent=1 // pred_fallthru
      _
    // Predicated region
    $region34: #{tpu_custom_call.1} parent=1 // pred_check
      _
    $region35: #{tpu_custom_call.1} parent=1 // pred_check_branch
      %72 = sbr.rel (0) target = $region37
    $region36: #{tpu_custom_call.1} parent=1 // pred_region
      %73 = dma.done [#allocation6], 128
    $region37: #{tpu_custom_call.1} parent=1 // pred_fallthru
      _
    // Predicated region
    $region38: #{tpu_custom_call.1} parent=1 // pred_check
      _
    $region39: #{tpu_custom_call.1} parent=1 // pred_check_branch
      %75 = sbr.rel (0) target = $region41
    $region40: #{tpu_custom_call.1} parent=1 // pred_region
      %76 = dma.done [#allocation6], 2048
    $region41: #{tpu_custom_call.1} parent=1 // pred_fallthru
      _
    // Predicated region
    $region42: #{tpu_custom_call.1} parent=1 // pred_check
      _
    $region43: #{tpu_custom_call.1} parent=1 // pred_check_branch
      %78 = sbr.rel (0) target = $region45
    $region44: #{tpu_custom_call.1} parent=1 // pred_region
      %79 = dma.done [#allocation9], 2048
    $region45: #{tpu_custom_call.1} parent=1 // pred_fallthru
      _
    %v81 = vld [vmem:[#allocation2] sm:$0xf]
    %v82 = vld [vmem:[#allocation5] sm:$0xf]
    %v83 = vld [vmem:[#allocation5 + $0x4] sm:$0x1]
    %v84 = vld [vmem:[%s2] sm:$0x1]
    %v86 = vlaneseq
    %v87 = vshrl.u32 %v86, 7
    %v88 = vsub.s32 0, %v87
    %v89 = vrot.slane %v84, %v88
    %v93 = vunpack.c.l.b16 %v82
    %v94 = vunpack.c.l.b16 %v83
    %v95 = vpack.c.b16 %v94, %v93
    %vm96 = vcmask 80896
    %v98 = vsel %vm96, %v81, 0
    %vm100 = vcmask 1044480
    %v102 = vsel %vm100, %v95, 0
    %104 = vmatprep.subr.bf16.mxu0 0
    %105 = vmatpush1.bf16.msra.mxu0 %v102
    %106 = vmatprep.subr.bf16.mxu0 0
    %107 = vmatpush1.bf16.msra.mxu0 0
    %108 = vmatprep.subr.bf16.mxu0 0
    %109 = vmatpush1.bf16.msra.mxu0 0
    %110 = vmatprep.subr.bf16.mxu0 0
    %111 = vmatpush1.bf16.msra.mxu0 0
    %112 = vmatprep.subr.bf16.mxu0 0
    %113 = vmatpush1.bf16.msra.mxu0 0
    %114 = vmatprep.subr.bf16.mxu0 0
    %115 = vmatpush1.bf16.msra.mxu0 0
    %116 = vmatprep.subr.bf16.mxu0 0
    %117 = vmatpush1.bf16.msra.mxu0 0
    %118 = vmatprep.subr.bf16.mxu0 0
    %119 = vmatpush1.bf16.msra.mxu0 0
    %120 = vmatprep.subr.bf16.mxu0 0
    %121 = vmatpush1.bf16.msra.mxu0 0
    %122 = vmatprep.subr.bf16.mxu0 0
    %123 = vmatpush1.bf16.msra.mxu0 0
    %124 = vmatprep.subr.bf16.mxu0 0
    %125 = vmatpush1.bf16.msra.mxu0 0
    %126 = vmatprep.subr.bf16.mxu0 0
    %127 = vmatpush1.bf16.msra.mxu0 0
    %128 = vmatprep.subr.bf16.mxu0 0
    %129 = vmatpush1.bf16.msra.mxu0 0
    %130 = vmatprep.subr.bf16.mxu0 0
    %131 = vmatpush1.bf16.msra.mxu0 0
    %132 = vmatprep.subr.bf16.mxu0 0
    %133 = vmatpush1.bf16.msra.mxu0 0
    %134 = vmatprep.subr.bf16.mxu0 0
    %135 = vmatpush1.bf16.msra.mxu0 0
    %136 = vmatprep.mubr.bf16.mxu0 0
    %137 = vmatmul.mubr.bf16.gmra.mrb[0].mxu0 %v98
    %v138 = vpop.f32.mrb[0].mxu0
    %v139 = vadd.f32 %v89, %v138
    %v140 = vpop.f32.mrb[0].mxu0
    %v141 = vpop.f32.mrb[0].mxu0
    %v142 = vpop.f32.mrb[0].mxu0
    %143 = vdwg.mxu0
    %v144 = vmax.f32 %v139, 0.0
    %v145 = vpack.c.bf16 %v144, %v144
    %v146 = vld [vmem:[#allocation7] sm:$0xff]
    %v147 = vld [vmem:[#allocation7 + $0x8] sm:$0xff]
    %v148 = vld [vmem:[#allocation7 + $0x10] sm:$0xff]
    %v149 = vld [vmem:[#allocation7 + $0x18] sm:$0xff]
    %v150 = vld [vmem:[#allocation7 + $0x20] sm:$0xff]
    %v151 = vld [vmem:[#allocation7 + $0x28] sm:$0xff]
    %v152 = vld [vmem:[#allocation7 + $0x30] sm:$0xff]
    %v153 = vld [vmem:[#allocation7 + $0x38] sm:$0xff]
    %v154 = vld [vmem:[#allocation7 + $0x40] sm:$0xff]
    %v155 = vld [vmem:[#allocation7 + $0x48] sm:$0xff]
    %v156 = vld [vmem:[#allocation7 + $0x50] sm:$0xff]
    %v157 = vld [vmem:[#allocation7 + $0x58] sm:$0xff]
    %v158 = vld [vmem:[#allocation7 + $0x60] sm:$0xff]
    %v159 = vld [vmem:[#allocation7 + $0x68] sm:$0xff]
    %v160 = vld [vmem:[#allocation7 + $0x70] sm:$0xff]
    %v161 = vld [vmem:[#allocation7 + $0x78] sm:$0xff]
    %v162 = vld [vmem:[%s4] sm:$0x3]
    %v164 = vlaneseq
    %v165 = vshrl.u32 %v164, 7
    %v166 = vsub.s32 0, %v165
    %v167 = vrot.slane %v162, %v166
    %v168 = vlaneseq
    %v169 = vshrl.u32 %v168, 7
    %v170 = vsub.s32 1, %v169
    %v171 = vrot.slane %v162, %v170
    %v190 = vunpack.c.l.b16 %v146
    %v191 = vunpack.c.h.b16 %v146
    %v192 = vunpack.c.l.b16 %v147
    %v193 = vunpack.c.h.b16 %v147
    %v194 = vunpack.c.l.b16 %v148
    %v195 = vunpack.c.h.b16 %v148
    %v196 = vunpack.c.l.b16 %v149
    %v197 = vunpack.c.h.b16 %v149
    %v198 = vunpack.c.l.b16 %v150
    %v199 = vunpack.c.h.b16 %v150
    %v200 = vunpack.c.l.b16 %v151
    %v201 = vunpack.c.h.b16 %v151
    %v202 = vunpack.c.l.b16 %v152
    %v203 = vunpack.c.h.b16 %v152
    %v204 = vunpack.c.l.b16 %v153
    %v205 = vunpack.c.h.b16 %v153
    %v206 = vunpack.c.l.b16 %v154
    %v207 = vunpack.c.h.b16 %v154
    %v208 = vunpack.c.l.b16 %v155
    %v209 = vunpack.c.h.b16 %v155
    %v210 = vunpack.c.l.b16 %v156
    %v211 = vunpack.c.h.b16 %v156
    %v212 = vunpack.c.l.b16 %v157
    %v213 = vunpack.c.h.b16 %v157
    %v214 = vunpack.c.l.b16 %v158
    %v215 = vunpack.c.h.b16 %v158
    %v216 = vunpack.c.l.b16 %v159
    %v217 = vunpack.c.h.b16 %v159
    %v218 = vunpack.c.l.b16 %v160
    %v219 = vunpack.c.h.b16 %v160
    %v220 = vunpack.c.l.b16 %v161
    %v221 = vunpack.c.h.b16 %v161
    %v222 = vpack.c.b16 %v192, %v190
    %v223 = vpack.c.b16 %v193, %v191
    %v224 = vpack.c.b16 %v196, %v194
    %v225 = vpack.c.b16 %v197, %v195
    %v226 = vpack.c.b16 %v200, %v198
    %v227 = vpack.c.b16 %v201, %v199
    %v228 = vpack.c.b16 %v204, %v202
    %v229 = vpack.c.b16 %v205, %v203
    %v230 = vpack.c.b16 %v208, %v206
    %v231 = vpack.c.b16 %v209, %v207
    %v232 = vpack.c.b16 %v212, %v210
    %v233 = vpack.c.b16 %v213, %v211
    %v234 = vpack.c.b16 %v216, %v214
    %v235 = vpack.c.b16 %v217, %v215
    %v236 = vpack.c.b16 %v220, %v218
    %v237 = vpack.c.b16 %v221, %v219
    %254 = vmatprep.subr.bf16.mxu0 %v223
    %255 = vmatpush1.bf16.msra.mxu0 %v222
    %256 = vmatprep.subr.bf16.mxu0 %v225
    %257 = vmatpush1.bf16.msra.mxu0 %v224
    %258 = vmatprep.subr.bf16.mxu0 %v227
    %259 = vmatpush1.bf16.msra.mxu0 %v226
    %260 = vmatprep.subr.bf16.mxu0 %v229
    %261 = vmatpush1.bf16.msra.mxu0 %v228
    %262 = vmatprep.subr.bf16.mxu0 %v231
    %263 = vmatpush1.bf16.msra.mxu0 %v230
    %264 = vmatprep.subr.bf16.mxu0 %v233
    %265 = vmatpush1.bf16.msra.mxu0 %v232
    %266 = vmatprep.subr.bf16.mxu0 %v235
    %267 = vmatpush1.bf16.msra.mxu0 %v234
    %268 = vmatprep.subr.bf16.mxu0 %v237
    %269 = vmatpush1.bf16.msra.mxu0 %v236
    %270 = vmatprep.subr.bf16.mxu0 0
    %271 = vmatpush1.bf16.msra.mxu0 0
    %272 = vmatprep.subr.bf16.mxu0 0
    %273 = vmatpush1.bf16.msra.mxu0 0
    %274 = vmatprep.subr.bf16.mxu0 0
    %275 = vmatpush1.bf16.msra.mxu0 0
    %276 = vmatprep.subr.bf16.mxu0 0
    %277 = vmatpush1.bf16.msra.mxu0 0
    %278 = vmatprep.subr.bf16.mxu0 0
    %279 = vmatpush1.bf16.msra.mxu0 0
    %280 = vmatprep.subr.bf16.mxu0 0
    %281 = vmatpush1.bf16.msra.mxu0 0
    %282 = vmatprep.subr.bf16.mxu0 0
    %283 = vmatpush1.bf16.msra.mxu0 0
    %284 = vmatprep.subr.bf16.mxu0 0
    %285 = vmatpush1.bf16.msra.mxu0 0
    %286 = vmatprep.mubr.bf16.mxu0 0
    %287 = vmatmul.mubr.bf16.gmra.mrb[0].mxu0 %v145
    %v288 = vpop.f32.mrb[0].mxu0
    %v289 = vadd.f32 %v167, %v288
    %v290 = vpop.f32.mrb[0].mxu0
    %v291 = vadd.f32 %v171, %v290
    %v292 = vpop.f32.mrb[0].mxu0
    %v293 = vpop.f32.mrb[0].mxu0
    %294 = vdwg.mxu0
    %v295 = vmax.f32 %v289, 0.0
    %v296 = vmax.f32 %v291, 0.0
    %v297 = vpack.c.bf16 %v295, %v295
    %v298 = vpack.c.bf16 %v296, %v296
    %v299 = vld [vmem:[#allocation8] sm:$0xf]
    %v300 = vld [vmem:[#allocation8 + $0x4] sm:$0xf]
    %v301 = vld [vmem:[#allocation8 + $0x8] sm:$0xf]
    %v302 = vld [vmem:[#allocation8 + $0xc] sm:$0xf]
    %v303 = vld [vmem:[#allocation8 + $0x10] sm:$0xf]
    %v304 = vld [vmem:[#allocation8 + $0x14] sm:$0xf]
    %v305 = vld [vmem:[#allocation8 + $0x18] sm:$0xf]
    %v306 = vld [vmem:[#allocation8 + $0x1c] sm:$0xf]
    %v307 = vld [vmem:[#allocation8 + $0x20] sm:$0xf]
    %v308 = vld [vmem:[#allocation8 + $0x24] sm:$0xf]
    %v309 = vld [vmem:[#allocation8 + $0x28] sm:$0xf]
    %v310 = vld [vmem:[#allocation8 + $0x2c] sm:$0xf]
    %v311 = vld [vmem:[#allocation8 + $0x30] sm:$0xf]
    %v312 = vld [vmem:[#allocation8 + $0x34] sm:$0xf]
    %v313 = vld [vmem:[#allocation8 + $0x38] sm:$0xf]
    %v314 = vld [vmem:[#allocation8 + $0x3c] sm:$0xf]
    %v315 = vld [vmem:[#allocation8 + $0x40] sm:$0xf]
    %v316 = vld [vmem:[#allocation8 + $0x44] sm:$0xf]
    %v317 = vld [vmem:[#allocation8 + $0x48] sm:$0xf]
    %v318 = vld [vmem:[#allocation8 + $0x4c] sm:$0xf]
    %v319 = vld [vmem:[#allocation8 + $0x50] sm:$0xf]
    %v320 = vld [vmem:[#allocation8 + $0x54] sm:$0xf]
    %v321 = vld [vmem:[#allocation8 + $0x58] sm:$0xf]
    %v322 = vld [vmem:[#allocation8 + $0x5c] sm:$0xf]
    %v323 = vld [vmem:[#allocation8 + $0x60] sm:$0xf]
    %v324 = vld [vmem:[#allocation8 + $0x64] sm:$0xf]
    %v325 = vld [vmem:[#allocation8 + $0x68] sm:$0xf]
    %v326 = vld [vmem:[#allocation8 + $0x6c] sm:$0xf]
    %v327 = vld [vmem:[#allocation8 + $0x70] sm:$0xf]
    %v328 = vld [vmem:[#allocation8 + $0x74] sm:$0xf]
    %v329 = vld [vmem:[#allocation8 + $0x78] sm:$0xf]
    %v330 = vld [vmem:[#allocation8 + $0x7c] sm:$0xf]
    %v331 = vld [vmem:[%s6] sm:$0x1]
    %v333 = vlaneseq
    %v334 = vshrl.u32 %v333, 7
    %v335 = vsub.s32 0, %v334
    %v336 = vrot.slane %v331, %v335
    %v370 = vunpack.c.l.b16 %v299
    %v371 = vunpack.c.l.b16 %v300
    %v372 = vunpack.c.l.b16 %v301
    %v373 = vunpack.c.l.b16 %v302
    %v374 = vunpack.c.l.b16 %v303
    %v375 = vunpack.c.l.b16 %v304
    %v376 = vunpack.c.l.b16 %v305
    %v377 = vunpack.c.l.b16 %v306
    %v378 = vunpack.c.l.b16 %v307
    %v379 = vunpack.c.l.b16 %v308
    %v380 = vunpack.c.l.b16 %v309
    %v381 = vunpack.c.l.b16 %v310
    %v382 = vunpack.c.l.b16 %v311
    %v383 = vunpack.c.l.b16 %v312
    %v384 = vunpack.c.l.b16 %v313
    %v385 = vunpack.c.l.b16 %v314
    %v386 = vunpack.c.l.b16 %v315
    %v387 = vunpack.c.l.b16 %v316
    %v388 = vunpack.c.l.b16 %v317
    %v389 = vunpack.c.l.b16 %v318
    %v390 = vunpack.c.l.b16 %v319
    %v391 = vunpack.c.l.b16 %v320
    %v392 = vunpack.c.l.b16 %v321
    %v393 = vunpack.c.l.b16 %v322
    %v394 = vunpack.c.l.b16 %v323
    %v395 = vunpack.c.l.b16 %v324
    %v396 = vunpack.c.l.b16 %v325
    %v397 = vunpack.c.l.b16 %v326
    %v398 = vunpack.c.l.b16 %v327
    %v399 = vunpack.c.l.b16 %v328
    %v400 = vunpack.c.l.b16 %v329
    %v401 = vunpack.c.l.b16 %v330
    %v402 = vpack.c.b16 %v371, %v370
    %v403 = vpack.c.b16 %v373, %v372
    %v404 = vpack.c.b16 %v375, %v374
    %v405 = vpack.c.b16 %v377, %v376
    %v406 = vpack.c.b16 %v379, %v378
    %v407 = vpack.c.b16 %v381, %v380
    %v408 = vpack.c.b16 %v383, %v382
    %v409 = vpack.c.b16 %v385, %v384
    %v410 = vpack.c.b16 %v387, %v386
    %v411 = vpack.c.b16 %v389, %v388
    %v412 = vpack.c.b16 %v391, %v390
    %v413 = vpack.c.b16 %v393, %v392
    %v414 = vpack.c.b16 %v395, %v394
    %v415 = vpack.c.b16 %v397, %v396
    %v416 = vpack.c.b16 %v399, %v398
    %v417 = vpack.c.b16 %v401, %v400
    %434 = vmatprep.subr.bf16.mxu0 0
    %435 = vmatpush1.bf16.msra.mxu0 %v402
    %436 = vmatprep.subr.bf16.mxu0 0
    %437 = vmatpush1.bf16.msra.mxu0 %v403
    %438 = vmatprep.subr.bf16.mxu0 0
    %439 = vmatpush1.bf16.msra.mxu0 %v404
    %440 = vmatprep.subr.bf16.mxu0 0
    %441 = vmatpush1.bf16.msra.mxu0 %v405
    %442 = vmatprep.subr.bf16.mxu0 0
    %443 = vmatpush1.bf16.msra.mxu0 %v406
    %444 = vmatprep.subr.bf16.mxu0 0
    %445 = vmatpush1.bf16.msra.mxu0 %v407
    %446 = vmatprep.subr.bf16.mxu0 0
    %447 = vmatpush1.bf16.msra.mxu0 %v408
    %448 = vmatprep.subr.bf16.mxu0 0
    %449 = vmatpush1.bf16.msra.mxu0 %v409
    %450 = vmatprep.subr.bf16.mxu0 0
    %451 = vmatpush1.bf16.msra.mxu0 %v410
    %452 = vmatprep.subr.bf16.mxu0 0
    %453 = vmatpush1.bf16.msra.mxu0 %v411
    %454 = vmatprep.subr.bf16.mxu0 0
    %455 = vmatpush1.bf16.msra.mxu0 %v412
    %456 = vmatprep.subr.bf16.mxu0 0
    %457 = vmatpush1.bf16.msra.mxu0 %v413
    %458 = vmatprep.subr.bf16.mxu0 0
    %459 = vmatpush1.bf16.msra.mxu0 %v414
    %460 = vmatprep.subr.bf16.mxu0 0
    %461 = vmatpush1.bf16.msra.mxu0 %v415
    %462 = vmatprep.subr.bf16.mxu0 0
    %463 = vmatpush1.bf16.msra.mxu0 %v416
    %464 = vmatprep.subr.bf16.mxu0 0
    %465 = vmatpush1.bf16.msra.mxu0 %v417
    %466 = vmatprep.mubr.bf16.mxu0 %v298
    %467 = vmatmul.mubr.bf16.gmra.mrb[0].mxu0 %v297
    %v468 = vpop.f32.mrb[0].mxu0
    %v469 = vadd.f32 %v336, %v468
    %v470 = vpop.f32.mrb[0].mxu0
    %v471 = vpop.f32.mrb[0].mxu0
    %v472 = vpop.f32.mrb[0].mxu0
    %473 = vdwg.mxu0
    %474 = vst [vmem:[#allocation10] sm:$0xff] %v469
    // Predicated region
    $region46: #{tpu_custom_call.1} parent=1 // pred_check
      _
    $region47: #{tpu_custom_call.1} parent=1 // pred_check_branch
      %476 = sbr.rel (0) target = $region49
    $region48: #{tpu_custom_call.1} parent=1 // pred_region
      %s478 = ssub.s32 128, 128
      %479 = vsyncadd [#allocation4], %s478
      %s481 = sshll.u32 [#allocation10], 4
      %s482 = int_to_ptr.vmem [resolvable:$true] %s481
      %484 = dma.vmem_to_hbm [thread:$0]  %s482, 128, %s7, [#allocation4]
    $region49: #{tpu_custom_call.1} parent=1 // pred_fallthru
      _
    // Predicated region
    $region50: #{tpu_custom_call.1} parent=1 // pred_check
      _
    $region51: #{tpu_custom_call.1} parent=1 // pred_check_branch
      %486 = sbr.rel (0) target = $region53
    $region52: #{tpu_custom_call.1} parent=1 // pred_region
      %487 = dma.done [#allocation4], 128
    $region53: #{tpu_custom_call.1} parent=1 // pred_fallthru
      _
    %488 = vsyncpa [#allocation3], 1
    %489 = vsyncpa [#allocation6], 1
    %490 = vsyncpa [#allocation9], 1
    %491 = vsyncpa [#allocation4], 1

</llo_original>
